<compile_context>
chip_gen: v5e
topology: v5e:2x2
jax: 0.10.0
libtpu: 0.0.40
codegen_flags: <defaults>
</compile_context>

<pallas_src>
import functools

import jax
import jax.numpy as jnp
from jax.experimental import pallas as pl
from jax.experimental.pallas import tpu as pltpu

DEFAULT_TILE_B = 512  # batch rows per grid step (multiple of 8 sublanes)


def mlp_kernel(x_ref, w1_ref, b1_ref, w2_ref, b2_ref, o_ref):
    # Layer 1: Linear (f32 operands, f32 MXU accumulation) + bias + ReLU.
    h = jnp.dot(x_ref[...], w1_ref[...], preferred_element_type=jnp.float32)
    h = jnp.maximum(h + b1_ref[...], 0.0)          # b1 is (1, H), broadcasts
    # Dropout(0.5): inference-mode identity (PyTorch eval semantics).
    # TODO(synk): training-mode dropout would need pltpu.prng_seed +
    #             pltpu.stateful_bernoulli masking and a 1/(1-p) rescale.
    # Layer 2: Linear.
    y = jnp.dot(h, w2_ref[...], preferred_element_type=jnp.float32)
    o_ref[...] = (y + b2_ref[...]).astype(o_ref.dtype)


def _round_up(v, m):
    return (v + m - 1) // m * m


def _pick_tile(batch, tile_b):
    """Batch rows per grid step: as large as possible, multiple of 8,
    but keep >= 2 grid steps when the batch allows it (v7x has 2 TCs and
    shards 'parallel' grid axes across them; on v5e/v6e extra steps are
    nearly free at these tile sizes)."""
    tile = min(tile_b, _round_up(batch, 8))
    if pl.cdiv(batch, tile) == 1 and batch >= 16:
        tile = _round_up(pl.cdiv(batch, 2), 8)
    return tile


@functools.partial(jax.jit, static_argnames=("tile_b",))
def simple_nn_forward(x, w1, b1, w2, b2, *, tile_b=DEFAULT_TILE_B):
    """Fused eval-mode forward pass of simpleNN.

    x : [B, D_in] float32
    w1: [D_in, H]  b1: [1, H]     (weights pre-transposed vs torch [out, in])
    w2: [H, D_out] b2: [1, D_out]
    returns [B, D_out] float32
    """
    B, d_in = x.shape
    h_dim = w1.shape[1]
    d_out = w2.shape[1]

    tile = _pick_tile(B, tile_b)
    grid = (pl.cdiv(B, tile),)   # ragged last tile is masked by Pallas

    out = pl.pallas_call(
        mlp_kernel,
        out_shape=jax.ShapeDtypeStruct((B, d_out), jnp.float32),
        grid_spec=pltpu.PrefetchScalarGridSpec(
            num_scalar_prefetch=0,
            grid=grid,
            in_specs=[
                # x: streamed per batch tile, unpadded (last dim = full D_in).
                pl.BlockSpec((tile, d_in), lambda i: (i, 0)),
                # weights/biases: constant index_map -> VMEM-resident.
                # (If these ever grow to real model sizes, consider
                #  pipeline_mode=pl.Buffered(1) or tiling H/N; irrelevant here.)
                pl.BlockSpec((d_in, h_dim), lambda i: (0, 0)),
                pl.BlockSpec((1, h_dim), lambda i: (0, 0)),
                pl.BlockSpec((h_dim, d_out), lambda i: (0, 0)),
                pl.BlockSpec((1, d_out), lambda i: (0, 0)),
            ],
            out_specs=pl.BlockSpec((tile, d_out), lambda i: (i, 0)),
        ),
        compiler_params=pltpu.CompilerParams(
            dimension_semantics=("parallel",),
        ),
    )(x, w1, b1, w2, b2)

    return out


def init_params(key, input_dim, hid_dim, output_dim):
    """Deterministic init matching nn.Linear shapes (uniform +/- 1/sqrt(fan_in))."""
    k1, k2, k3, k4 = jax.random.split(key, 4)
    bound1 = 1.0 / jnp.sqrt(input_dim)
    bound2 = 1.0 / jnp.sqrt(hid_dim)
    # Stored pre-transposed: [in, out]
    w1 = jax.random.uniform(k1, (input_dim, hid_dim), jnp.float32, -bound1, bound1)
    b1 = jax.random.uniform(k2, (1, hid_dim), jnp.float32, -bound1, bound1)
    w2 = jax.random.uniform(k3, (hid_dim, output_dim), jnp.float32, -bound2, bound2)
    b2 = jax.random.uniform(k4, (1, output_dim), jnp.float32, -bound2, bound2)
    return w1, b1, w2, b2


if __name__ == "__main__":
    # Shapes consistent with the module: input_dim=32, hid=32, out=8.
    # Batch of 256 -> two grid steps of 128 rows (demonstrates the batch grid).
    B, INPUT_DIM, HID_DIM, OUTPUT_DIM = 256, 32, 32, 8

    key = jax.random.PRNGKey(0)
    kx, kp = jax.random.split(key)
    x = jax.random.normal(kx, (B, INPUT_DIM), dtype=jnp.float32)
    w1, b1, w2, b2 = init_params(kp, INPUT_DIM, HID_DIM, OUTPUT_DIM)

    out = simple_nn_forward(x, w1, b1, w2, b2)
    out = jax.block_until_ready(out)
    assert out.shape == (B, OUTPUT_DIM)

    # Reference: full-f32 math. Tolerance covers the MXU's default-precision
    # f32 matmul (bf16-pass decomposition) vs XLA's reference dot.
    ref_f32 = jnp.maximum(x @ w1 + b1, 0.0) @ w2 + b2
    assert jnp.allclose(out, ref_f32, atol=2e-2, rtol=2e-2), \
        "mismatch vs f32 reference"

    print("KERNEL_OK")
</pallas_src>

<mosaic_0001>
module attributes {stable_mosaic.version = 11 : i64} {
  func.func @mlp_kernel(%arg0: i32, %arg1: memref<128x32xf32, #tpu.memory_space<vmem>>, %arg2: memref<32x32xf32, #tpu.memory_space<vmem>>, %arg3: memref<1x32xf32, #tpu.memory_space<vmem>>, %arg4: memref<32x8xf32, #tpu.memory_space<vmem>>, %arg5: memref<1x8xf32, #tpu.memory_space<vmem>>, %arg6: memref<128x8xf32, #tpu.memory_space<vmem>>) attributes {dimension_semantics = [#tpu.dimension_semantics<parallel>], iteration_bounds = array<i64: 2>, scalar_prefetch = 0 : i64, scratch_operands = 0 : i64, tpu.core_type = #tpu.core_type<tc>, window_params = [{transform_indices = @transform_0, window_bounds = array<i64: 128, 32>}, {pipeline_mode = #tpu.pipeline_mode<synchronous>, transform_indices = @transform_1, window_bounds = array<i64: 32, 32>}, {pipeline_mode = #tpu.pipeline_mode<synchronous>, transform_indices = @transform_2, window_bounds = array<i64: 1, 32>}, {pipeline_mode = #tpu.pipeline_mode<synchronous>, transform_indices = @transform_3, window_bounds = array<i64: 32, 8>}, {pipeline_mode = #tpu.pipeline_mode<synchronous>, transform_indices = @transform_4, window_bounds = array<i64: 1, 8>}, {transform_indices = @transform_5, window_bounds = array<i64: 128, 8>}]} {
    %c0 = arith.constant 0 : index
    %c0_0 = arith.constant 0 : index
    %0 = vector.load %arg1[%c0, %c0_0] : memref<128x32xf32, #tpu.memory_space<vmem>>, vector<128x32xf32>
    %c0_1 = arith.constant 0 : index
    %c0_2 = arith.constant 0 : index
    %1 = vector.load %arg2[%c0_1, %c0_2] : memref<32x32xf32, #tpu.memory_space<vmem>>, vector<32x32xf32>
    %cst = arith.constant dense<0.000000e+00> : vector<128x32xf32>
    %2 = tpu.matmul %0, %1, %cst {dimension_numbers = #tpu.dot_dimension_numbers<[1], [0], [0], [1], [0, 0, 1, 1], [], []>} : vector<128x32xf32>, vector<32x32xf32>, vector<128x32xf32> -> vector<128x32xf32>
    %c0_3 = arith.constant 0 : index
    %c0_4 = arith.constant 0 : index
    %3 = vector.load %arg3[%c0_3, %c0_4] : memref<1x32xf32, #tpu.memory_space<vmem>>, vector<1x32xf32>
    %4 = vector.broadcast %3 : vector<1x32xf32> to vector<128x32xf32>
    %5 = arith.addf %2, %4 : vector<128x32xf32>
    %cst_5 = arith.constant 0.000000e+00 : f32
    %6 = vector.broadcast %cst_5 : f32 to vector<128x32xf32>
    %7 = arith.maximumf %5, %6 : vector<128x32xf32>
    %c0_6 = arith.constant 0 : index
    %c0_7 = arith.constant 0 : index
    %8 = vector.load %arg4[%c0_6, %c0_7] : memref<32x8xf32, #tpu.memory_space<vmem>>, vector<32x8xf32>
    %cst_8 = arith.constant dense<0.000000e+00> : vector<128x8xf32>
    %9 = tpu.matmul %7, %8, %cst_8 {dimension_numbers = #tpu.dot_dimension_numbers<[1], [0], [0], [1], [0, 0, 1, 1], [], []>} : vector<128x32xf32>, vector<32x8xf32>, vector<128x8xf32> -> vector<128x8xf32>
    %c0_9 = arith.constant 0 : index
    %c0_10 = arith.constant 0 : index
    %10 = vector.load %arg5[%c0_9, %c0_10] : memref<1x8xf32, #tpu.memory_space<vmem>>, vector<1x8xf32>
    %11 = vector.broadcast %10 : vector<1x8xf32> to vector<128x8xf32>
    %12 = arith.addf %9, %11 : vector<128x8xf32>
    %c0_11 = arith.constant 0 : index
    %c0_12 = arith.constant 0 : index
    %13 = vector.load %arg6[%c0_11, %c0_12] : memref<128x8xf32, #tpu.memory_space<vmem>>, vector<128x8xf32>
    tpu.vector_store %arg6[%c0_11, %c0_12], %12 {strides = array<i32>} : memref<128x8xf32, #tpu.memory_space<vmem>>, vector<128x8xf32>,
    return
  }
  func.func @transform_0(%arg0: i32) -> (i32, i32) {
    %c0_i32 = arith.constant 0 : i32
    %c0_i32_0 = arith.constant 0 : i32
    return %arg0, %c0_i32 : i32, i32
  }
  func.func @transform_1(%arg0: i32) -> (i32, i32) {
    %c0_i32 = arith.constant 0 : i32
    %c0_i32_0 = arith.constant 0 : i32
    %c0_i32_1 = arith.constant 0 : i32
    return %c0_i32, %c0_i32_0 : i32, i32
  }
  func.func @transform_2(%arg0: i32) -> (i32, i32) {
    %c0_i32 = arith.constant 0 : i32
    %c0_i32_0 = arith.constant 0 : i32
    %c0_i32_1 = arith.constant 0 : i32
    return %c0_i32, %c0_i32_0 : i32, i32
  }
  func.func @transform_3(%arg0: i32) -> (i32, i32) {
    %c0_i32 = arith.constant 0 : i32
    %c0_i32_0 = arith.constant 0 : i32
    %c0_i32_1 = arith.constant 0 : i32
    return %c0_i32, %c0_i32_0 : i32, i32
  }
  func.func @transform_4(%arg0: i32) -> (i32, i32) {
    %c0_i32 = arith.constant 0 : i32
    %c0_i32_0 = arith.constant 0 : i32
    %c0_i32_1 = arith.constant 0 : i32
    return %c0_i32, %c0_i32_0 : i32, i32
  }
  func.func @transform_5(%arg0: i32) -> (i32, i32) {
    %c0_i32 = arith.constant 0 : i32
    %c0_i32_0 = arith.constant 0 : i32
    return %arg0, %c0_i32 : i32, i32
  }
}

</mosaic_0001>

<llo_original>
// kernel: simple_nn_forward.1
$region0: #{simple_nn_forward.1}
  #allocation0 [shape = 'u32[]', space=smem, size = 0x4, offset = 0x4, fixed_abs, tag = 'smem constant byte address 0x4 - core index']
  #allocation1 [shape = 'u32[72,128]{1,0:T(1,128)}', space=vmem, size = 0x9000, scoped, tag = 'internal scratch']
  %s0 = inlined_call_operand.vmem [shape: f32[256,32], index: 0, kind: input, shape index: {}]
  %s1 = inlined_call_operand.vmem [shape: f32[32,32], index: 1, kind: input, shape index: {}]
  %s2 = inlined_call_operand.vmem [shape: f32[1,32], index: 2, kind: input, shape index: {}]
  %s3 = inlined_call_operand.vmem [shape: f32[32,8], index: 3, kind: input, shape index: {}]
  %s4 = inlined_call_operand.vmem [shape: f32[1,8], index: 4, kind: input, shape index: {}]
  %s5 = inlined_call_operand.vmem [shape: f32[256,8], index: 5, kind: output, shape index: {}]
  %s6 = sld [smem:[#allocation0]]
  $region53: #{simple_nn_forward.1} parent=0
    _
  %s8 = ssub.s32 1, %s6
  %s9 = scalar_select 0, %s8, %s6
  loop: start=0, step=1, limit=4
  $region2: #{simple_nn_forward.1} parent=0 // loop_pre_header
    _
  $region3: #{simple_nn_forward.1} parent=0 // loop_header
    %s11 = sphi 0, %s15
    %p12 = scmp.ge.s32.totalorder %s11, 4
    %s21 = sphi 0, %s23
    %s24 = sphi 0, %s21
    %s25 = sphi 0, %s24
    %s41 = sphi 0, %s25
    %s45 = sphi 0, %s45
    %s47 = sphi 0, %s45
    %s48 = sphi 0, %s47
    %s62 = sphi 0, %s48
    %s66 = sphi 0, %s66
    %s68 = sphi 0, %s66
    %s69 = sphi 0, %s68
    %s83 = sphi 0, %s69
    %s87 = sphi 0, %s87
    %s89 = sphi 0, %s87
    %s90 = sphi 0, %s89
    %s104 = sphi 0, %s90
    %s108 = sphi 0, %s108
    %s110 = sphi 0, %s108
    %s111 = sphi 0, %s110
    %s125 = sphi 0, %s111
    %s131 = sphi 0, %s133
    %s134 = sphi 0, %s131
    %s135 = sphi 0, %s134
    %s151 = sphi 0, %s135
  $region4: #{simple_nn_forward.1} parent=0 // loop_header_branch
    %14 = sbr.rel (%p12) target = $region8
  $region5: #{simple_nn_forward.1} parent=0 // loop_body
    %s16 = ssub.s32 %s11, 1
    %s17 = ssub.s32 %s11, 2
    %s18 = sadd.s32 %s11, 1
    %s19 = ssub.s32 %s11, %s18
    %p20 = scmp.eq.s32.totalorder %s19, 0
    %s22 = sadd.s32 %s21, 1
    %s23 = scalar_select %p20, %s21, %s22
    %p26 = pneg %p20
    %p27 = scmp.eq.s32.totalorder %s11, 1
    %p28 = por %p26, %p27
    %p29 = scmp.ne.s32.totalorder %s21, %s24
    %p30 = scmp.eq.s32.totalorder %s11, 0
    %p31 = por %p29, %p30
    %p32 = scmp.ne.s32.totalorder %s21, %s24
    %p33 = scmp.eq.s32.totalorder %s16, 1
    %p34 = por %p32, %p33
    %p35 = scmp.ne.s32.totalorder %s24, %s25
    %p36 = scmp.eq.s32.totalorder %s16, 0
    %p37 = por %p35, %p36
    %p38 = scmp.ne.s32.totalorder %s24, %s25
    %p39 = scmp.eq.s32.totalorder %s17, 1
    %p40 = por %p38, %p39
    %p42 = scmp.ne.s32.totalorder %s25, %s41
    %p43 = scmp.eq.s32.totalorder %s17, 0
    %p44 = por %p42, %p43
    %s46 = sadd.s32 %s45, 1
    %p49 = scmp.eq.s32.totalorder %s11, 1
    %p50 = scmp.ne.s32.totalorder %s45, %s47
    %p51 = scmp.eq.s32.totalorder %s11, 0
    %p52 = por %p50, %p51
    %p53 = scmp.ne.s32.totalorder %s45, %s47
    %p54 = scmp.eq.s32.totalorder %s16, 1
    %p55 = por %p53, %p54
    %p56 = scmp.ne.s32.totalorder %s47, %s48
    %p57 = scmp.eq.s32.totalorder %s16, 0
    %p58 = por %p56, %p57
    %p59 = scmp.ne.s32.totalorder %s47, %s48
    %p60 = scmp.eq.s32.totalorder %s17, 1
    %p61 = por %p59, %p60
    %p63 = scmp.ne.s32.totalorder %s48, %s62
    %p64 = scmp.eq.s32.totalorder %s17, 0
    %p65 = por %p63, %p64
    %s67 = sadd.s32 %s66, 1
    %p70 = scmp.eq.s32.totalorder %s11, 1
    %p71 = scmp.ne.s32.totalorder %s66, %s68
    %p72 = scmp.eq.s32.totalorder %s11, 0
    %p73 = por %p71, %p72
    %p74 = scmp.ne.s32.totalorder %s66, %s68
    %p75 = scmp.eq.s32.totalorder %s16, 1
    %p76 = por %p74, %p75
    %p77 = scmp.ne.s32.totalorder %s68, %s69
    %p78 = scmp.eq.s32.totalorder %s16, 0
    %p79 = por %p77, %p78
    %p80 = scmp.ne.s32.totalorder %s68, %s69
    %p81 = scmp.eq.s32.totalorder %s17, 1
    %p82 = por %p80, %p81
    %p84 = scmp.ne.s32.totalorder %s69, %s83
    %p85 = scmp.eq.s32.totalorder %s17, 0
    %p86 = por %p84, %p85
    %s88 = sadd.s32 %s87, 1
    %p91 = scmp.eq.s32.totalorder %s11, 1
    %p92 = scmp.ne.s32.totalorder %s87, %s89
    %p93 = scmp.eq.s32.totalorder %s11, 0
    %p94 = por %p92, %p93
    %p95 = scmp.ne.s32.totalorder %s87, %s89
    %p96 = scmp.eq.s32.totalorder %s16, 1
    %p97 = por %p95, %p96
    %p98 = scmp.ne.s32.totalorder %s89, %s90
    %p99 = scmp.eq.s32.totalorder %s16, 0
    %p100 = por %p98, %p99
    %p101 = scmp.ne.s32.totalorder %s89, %s90
    %p102 = scmp.eq.s32.totalorder %s17, 1
    %p103 = por %p101, %p102
    %p105 = scmp.ne.s32.totalorder %s90, %s104
    %p106 = scmp.eq.s32.totalorder %s17, 0
    %p107 = por %p105, %p106
    %s109 = sadd.s32 %s108, 1
    %p112 = scmp.eq.s32.totalorder %s11, 1
    %p113 = scmp.ne.s32.totalorder %s108, %s110
    %p114 = scmp.eq.s32.totalorder %s11, 0
    %p115 = por %p113, %p114
    %p116 = scmp.ne.s32.totalorder %s108, %s110
    %p117 = scmp.eq.s32.totalorder %s16, 1
    %p118 = por %p116, %p117
    %p119 = scmp.ne.s32.totalorder %s110, %s111
    %p120 = scmp.eq.s32.totalorder %s16, 0
    %p121 = por %p119, %p120
    %p122 = scmp.ne.s32.totalorder %s110, %s111
    %p123 = scmp.eq.s32.totalorder %s17, 1
    %p124 = por %p122, %p123
    %p126 = scmp.ne.s32.totalorder %s111, %s125
    %p127 = scmp.eq.s32.totalorder %s17, 0
    %p128 = por %p126, %p127
    %s129 = ssub.s32 %s11, %s18
    %p130 = scmp.eq.s32.totalorder %s129, 0
    %s132 = sadd.s32 %s131, 1
    %s133 = scalar_select %p130, %s131, %s132
    %p136 = pneg %p130
    %p137 = scmp.eq.s32.totalorder %s11, 1
    %p138 = por %p136, %p137
    %p139 = scmp.ne.s32.totalorder %s131, %s134
    %p140 = scmp.eq.s32.totalorder %s11, 0
    %p141 = por %p139, %p140
    %p142 = scmp.ne.s32.totalorder %s131, %s134
    %p143 = scmp.eq.s32.totalorder %s16, 1
    %p144 = por %p142, %p143
    %p145 = scmp.ne.s32.totalorder %s134, %s135
    %p146 = scmp.eq.s32.totalorder %s16, 0
    %p147 = por %p145, %p146
    %p148 = scmp.ne.s32.totalorder %s134, %s135
    %p149 = scmp.eq.s32.totalorder %s17, 1
    %p150 = por %p148, %p149
    %p152 = scmp.ne.s32.totalorder %s135, %s151
    %p153 = scmp.eq.s32.totalorder %s17, 0
    %p154 = por %p152, %p153
    %p155 = scmp.le.s32.totalorder 1, %s11
    %p156 = scmp.lt.s32.totalorder %s11, 3
    %p157 = pnand %p155, %p156
    %p158 = pneg %p157
    // Predicated region
    $region9: #{simple_nn_forward.1} parent=5 // pred_check
      _
    $region10: #{simple_nn_forward.1} parent=5 // pred_check_branch
      %160 = sbr.rel (%p157) target = $region12
    $region11: #{simple_nn_forward.1} parent=5 // pred_region
      %s161 = ssub.s32 %s11, 1
      // Predicated region
      $region13: #{simple_nn_forward.1} parent=11 // pred_check
        %p162 = pneg %p58
      $region14: #{simple_nn_forward.1} parent=11 // pred_check_branch
        %164 = sbr.rel (%p162) target = $region16
      $region15: #{simple_nn_forward.1} parent=11 // pred_region
        _
      $region16: #{simple_nn_forward.1} parent=11 // pred_fallthru
        _
      // Predicated region
      $region17: #{simple_nn_forward.1} parent=11 // pred_check
        %p165 = pneg %p79
      $region18: #{simple_nn_forward.1} parent=11 // pred_check_branch
        %167 = sbr.rel (%p165) target = $region20
      $region19: #{simple_nn_forward.1} parent=11 // pred_region
        _
      $region20: #{simple_nn_forward.1} parent=11 // pred_fallthru
        _
      // Predicated region
      $region21: #{simple_nn_forward.1} parent=11 // pred_check
        %p168 = pneg %p100
      $region22: #{simple_nn_forward.1} parent=11 // pred_check_branch
        %170 = sbr.rel (%p168) target = $region24
      $region23: #{simple_nn_forward.1} parent=11 // pred_region
        _
      $region24: #{simple_nn_forward.1} parent=11 // pred_fallthru
        _
      // Predicated region
      $region25: #{simple_nn_forward.1} parent=11 // pred_check
        %p171 = pneg %p121
      $region26: #{simple_nn_forward.1} parent=11 // pred_check_branch
        %173 = sbr.rel (%p171) target = $region28
      $region27: #{simple_nn_forward.1} parent=11 // pred_region
        _
      $region28: #{simple_nn_forward.1} parent=11 // pred_fallthru
        _
    $region12: #{simple_nn_forward.1} parent=5 // pred_fallthru
      _
    %p174 = scmp.lt.s32.totalorder %s11, 2
    // Predicated region
    $region29: #{simple_nn_forward.1} parent=5 // pred_check
      %p175 = pneg %p174
    $region30: #{simple_nn_forward.1} parent=5 // pred_check_branch
      %177 = sbr.rel (%p175) target = $region32
    $region31: #{simple_nn_forward.1} parent=5 // pred_region
      // Predicated region
      $region33: #{simple_nn_forward.1} parent=31 // pred_check
        %p178 = pneg %p31
      $region34: #{simple_nn_forward.1} parent=31 // pred_check_branch
        %180 = sbr.rel (%p178) target = $region36
      $region35: #{simple_nn_forward.1} parent=31 // pred_region
        %s181 = smul.u32 16, %s11
        %p182 = scmp.lt.s32.totalorder %s181, 31
        %s183 = scalar_select %p182, %s181, 31
        %s184 = smul.addr %s183, 8
        %s185 = scalar_lea.vmem %s0, %s184
        %s186 = smul.u32 16, %s11
      $region36: #{simple_nn_forward.1} parent=31 // pred_fallthru
        _
    $region32: #{simple_nn_forward.1} parent=5 // pred_fallthru
      _
    %p187 = scmp.le.s32.totalorder 1, %s11
    %p188 = scmp.lt.s32.totalorder %s11, 3
    %p189 = pnand %p187, %p188
    %p190 = pneg %p189
    // Predicated region
    $region37: #{simple_nn_forward.1} parent=5 // pred_check
      _
    $region38: #{simple_nn_forward.1} parent=5 // pred_check_branch
      %192 = sbr.rel (%p189) target = $region40
    $region39: #{simple_nn_forward.1} parent=5 // pred_region
      %s193 = ssub.s32 %s11, 1
      %s194 = smul.u32 16, %s16
      %p195 = scmp.lt.s32.totalorder %s194, 31
      %s196 = scalar_select %p195, %s194, 31
      %s197 = smul.addr %s196, 8
      %s198 = scalar_lea.vmem %s0, %s197
      %p199 = pneg %p37
      %p200 = pneg %p34
      %p201 = pneg %p58
      %p202 = pneg %p55
      %p203 = pneg %p79
      %p204 = pneg %p76
      %p205 = pneg %p100
      %p206 = pneg %p97
      %p207 = pneg %p121
      %p208 = pneg %p118
      %p209 = pneg %p147
      %p210 = pneg %p144
      %s211 = smul.u32 16, %s16
      %p212 = scmp.lt.s32.totalorder %s211, 31
      %s213 = scalar_select %p212, %s211, 31
      %s214 = smul.addr %s213, 8
      %s215 = scalar_lea.vmem %s5, %s214
      %s216 = smul.u32 16, %s16
      %p217 = scmp.lt.s32.totalorder %s216, 31
      %s218 = scalar_select %p217, %s216, 31
      %s219 = smul.addr %s218, 8
      %s220 = scalar_lea.vmem %s0, %s219
      %s221 = smul.u32 16, %s16
      %s222 = smul.u32 16, %s16
      %p223 = scmp.lt.s32.totalorder %s222, 31
      %s224 = scalar_select %p223, %s222, 31
      %s225 = smul.addr %s224, 8
      %s226 = scalar_lea.vmem %s5, %s225
      %s227 = smul.u32 16, %s16
      %v228 = vld [vmem:[%s220] sm:$0xff]
      %v229 = vld [vmem:[%s220 + $0x8] sm:$0xff]
      %v230 = vld [vmem:[%s220 + $0x10] sm:$0xff]
      %v231 = vld [vmem:[%s220 + $0x18] sm:$0xff]
      %v232 = vld [vmem:[%s220 + $0x20] sm:$0xff]
      %v233 = vld [vmem:[%s220 + $0x28] sm:$0xff]
      %v234 = vld [vmem:[%s220 + $0x30] sm:$0xff]
      %v235 = vld [vmem:[%s220 + $0x38] sm:$0xff]
      %v236 = vld [vmem:[%s220 + $0x40] sm:$0xff]
      %v237 = vld [vmem:[%s220 + $0x48] sm:$0xff]
      %v238 = vld [vmem:[%s220 + $0x50] sm:$0xff]
      %v239 = vld [vmem:[%s220 + $0x58] sm:$0xff]
      %v240 = vld [vmem:[%s220 + $0x60] sm:$0xff]
      %v241 = vld [vmem:[%s220 + $0x68] sm:$0xff]
      %v242 = vld [vmem:[%s220 + $0x70] sm:$0xff]
      %v243 = vld [vmem:[%s220 + $0x78] sm:$0xff]
      %v244 = vld [vmem:[%s1] sm:$0xff]
      %v245 = vld [vmem:[%s1 + $0x8] sm:$0xff]
      %v246 = vld [vmem:[%s1 + $0x10] sm:$0xff]
      %v247 = vld [vmem:[%s1 + $0x18] sm:$0xff]
      %v248 = vld [vmem:[%s2] sm:$0x1]
      %v250 = vperm.slane %v248, 0
      %vm252 = vcmask 261120
      %v254 = vsel %vm252, %v228, 0
      %v257 = vsel %vm252, %v229, 0
      %v260 = vsel %vm252, %v230, 0
      %v263 = vsel %vm252, %v231, 0
      %v266 = vsel %vm252, %v232, 0
      %v269 = vsel %vm252, %v233, 0
      %v272 = vsel %vm252, %v234, 0
      %v275 = vsel %vm252, %v235, 0
      %v278 = vsel %vm252, %v236, 0
      %v281 = vsel %vm252, %v237, 0
      %v284 = vsel %vm252, %v238, 0
      %v287 = vsel %vm252, %v239, 0
      %v290 = vsel %vm252, %v240, 0
      %v293 = vsel %vm252, %v241, 0
      %v296 = vsel %vm252, %v242, 0
      %v299 = vsel %vm252, %v243, 0
      %301 = vmatpush.msra.mxu0 0.0
      %302 = vmatpush.msra.mxu0 0.0
      %303 = vmatpush.msra.mxu0 0.0
      %304 = vmatpush.msra.mxu0 0.0
      %305 = vmatpush.msra.mxu0 0.0
      %306 = vmatpush.msra.mxu0 0.0
      %307 = vmatpush.msra.mxu0 0.0
      %308 = vmatpush.msra.mxu0 0.0
      %309 = vmatpush.msra.mxu0 0.0
      %310 = vmatpush.msra.mxu0 0.0
      %311 = vmatpush.msra.mxu0 0.0
      %312 = vmatpush.msra.mxu0 0.0
      %313 = vmatpush.msra.mxu0 %v247
      %314 = vmatpush.msra.mxu0 %v246
      %315 = vmatpush.msra.mxu0 %v245
      %316 = vmatpush.msra.mxu0 %v244
      %317 = vmatmul.f32.gmra.mxu0 %v254
      %v318 = vpop.f32.mrf.mxu0
      %v319 = vadd.f32 %v250, %v318
      %320 = vmatmul.f32.gmra.mxu0 %v257
      %v321 = vpop.f32.mrf.mxu0
      %v322 = vadd.f32 %v250, %v321
      %323 = vmatmul.f32.gmra.mxu0 %v260
      %v324 = vpop.f32.mrf.mxu0
      %v325 = vadd.f32 %v250, %v324
      %326 = vmatmul.f32.gmra.mxu0 %v263
      %v327 = vpop.f32.mrf.mxu0
      %v328 = vadd.f32 %v250, %v327
      %329 = vmatmul.f32.gmra.mxu0 %v266
      %v330 = vpop.f32.mrf.mxu0
      %v331 = vadd.f32 %v250, %v330
      %332 = vmatmul.f32.gmra.mxu0 %v269
      %v333 = vpop.f32.mrf.mxu0
      %v334 = vadd.f32 %v250, %v333
      %335 = vmatmul.f32.gmra.mxu0 %v272
      %v336 = vpop.f32.mrf.mxu0
      %v337 = vadd.f32 %v250, %v336
      %338 = vmatmul.f32.gmra.mxu0 %v275
      %v339 = vpop.f32.mrf.mxu0
      %v340 = vadd.f32 %v250, %v339
      %341 = vmatmul.f32.gmra.mxu0 %v278
      %v342 = vpop.f32.mrf.mxu0
      %v343 = vadd.f32 %v250, %v342
      %344 = vmatmul.f32.gmra.mxu0 %v281
      %v345 = vpop.f32.mrf.mxu0
      %v346 = vadd.f32 %v250, %v345
      %347 = vmatmul.f32.gmra.mxu0 %v284
      %v348 = vpop.f32.mrf.mxu0
      %v349 = vadd.f32 %v250, %v348
      %350 = vmatmul.f32.gmra.mxu0 %v287
      %v351 = vpop.f32.mrf.mxu0
      %v352 = vadd.f32 %v250, %v351
      %353 = vmatmul.f32.gmra.mxu0 %v290
      %v354 = vpop.f32.mrf.mxu0
      %v355 = vadd.f32 %v250, %v354
      %356 = vmatmul.f32.gmra.mxu0 %v293
      %v357 = vpop.f32.mrf.mxu0
      %v358 = vadd.f32 %v250, %v357
      %359 = vmatmul.f32.gmra.mxu0 %v296
      %v360 = vpop.f32.mrf.mxu0
      %v361 = vadd.f32 %v250, %v360
      %362 = vmatmul.f32.gmra.mxu0 %v299
      %v363 = vpop.f32.mrf.mxu0
      %v364 = vadd.f32 %v250, %v363
      %365 = vdwg.mxu0
      %v366 = vmax.f32 %v319, 0.0
      %v367 = vmax.f32 %v322, 0.0
      %v368 = vmax.f32 %v325, 0.0
      %v369 = vmax.f32 %v328, 0.0
      %v370 = vmax.f32 %v331, 0.0
      %v371 = vmax.f32 %v334, 0.0
      %v372 = vmax.f32 %v337, 0.0
      %v373 = vmax.f32 %v340, 0.0
      %v374 = vmax.f32 %v343, 0.0
      %v375 = vmax.f32 %v346, 0.0
      %v376 = vmax.f32 %v349, 0.0
      %v377 = vmax.f32 %v352, 0.0
      %v378 = vmax.f32 %v355, 0.0
      %v379 = vmax.f32 %v358, 0.0
      %v380 = vmax.f32 %v361, 0.0
      %v381 = vmax.f32 %v364, 0.0
      %v382 = vld [vmem:[%s3] sm:$0xff]
      %v383 = vld [vmem:[%s3 + $0x8] sm:$0xff]
      %v384 = vld [vmem:[%s3 + $0x10] sm:$0xff]
      %v385 = vld [vmem:[%s3 + $0x18] sm:$0xff]
      %v386 = vld [vmem:[%s4] sm:$0x1]
      %v388 = vperm.slane %v386, 0
      %v391 = vsel %vm252, %v366, 0
      %v394 = vsel %vm252, %v367, 0
      %v397 = vsel %vm252, %v368, 0
      %v400 = vsel %vm252, %v369, 0
      %v403 = vsel %vm252, %v370, 0
      %v406 = vsel %vm252, %v371, 0
      %v409 = vsel %vm252, %v372, 0
      %v412 = vsel %vm252, %v373, 0
      %v415 = vsel %vm252, %v374, 0
      %v418 = vsel %vm252, %v375, 0
      %v421 = vsel %vm252, %v376, 0
      %v424 = vsel %vm252, %v377, 0
      %v427 = vsel %vm252, %v378, 0
      %v430 = vsel %vm252, %v379, 0
      %v433 = vsel %vm252, %v380, 0
      %v436 = vsel %vm252, %v381, 0
      %438 = vmatpush.msra.mxu0 0.0
      %439 = vmatpush.msra.mxu0 0.0
      %440 = vmatpush.msra.mxu0 0.0
      %441 = vmatpush.msra.mxu0 0.0
      %442 = vmatpush.msra.mxu0 0.0
      %443 = vmatpush.msra.mxu0 0.0
      %444 = vmatpush.msra.mxu0 0.0
      %445 = vmatpush.msra.mxu0 0.0
      %446 = vmatpush.msra.mxu0 0.0
      %447 = vmatpush.msra.mxu0 0.0
      %448 = vmatpush.msra.mxu0 0.0
      %449 = vmatpush.msra.mxu0 0.0
      %450 = vmatpush.msra.mxu0 %v385
      %451 = vmatpush.msra.mxu0 %v384
      %452 = vmatpush.msra.mxu0 %v383
      %453 = vmatpush.msra.mxu0 %v382
      %454 = vmatmul.f32.gmra.mxu0 %v391
      %v455 = vpop.f32.mrf.mxu0
      %v456 = vadd.f32 %v388, %v455
      %457 = vmatmul.f32.gmra.mxu0 %v394
      %v458 = vpop.f32.mrf.mxu0
      %v459 = vadd.f32 %v388, %v458
      %460 = vmatmul.f32.gmra.mxu0 %v397
      %v461 = vpop.f32.mrf.mxu0
      %v462 = vadd.f32 %v388, %v461
      %463 = vmatmul.f32.gmra.mxu0 %v400
      %v464 = vpop.f32.mrf.mxu0
      %v465 = vadd.f32 %v388, %v464
      %466 = vmatmul.f32.gmra.mxu0 %v403
      %v467 = vpop.f32.mrf.mxu0
      %v468 = vadd.f32 %v388, %v467
      %469 = vmatmul.f32.gmra.mxu0 %v406
      %v470 = vpop.f32.mrf.mxu0
      %v471 = vadd.f32 %v388, %v470
      %472 = vmatmul.f32.gmra.mxu0 %v409
      %v473 = vpop.f32.mrf.mxu0
      %v474 = vadd.f32 %v388, %v473
      %475 = vmatmul.f32.gmra.mxu0 %v412
      %v476 = vpop.f32.mrf.mxu0
      %v477 = vadd.f32 %v388, %v476
      %478 = vmatmul.f32.gmra.mxu0 %v415
      %v479 = vpop.f32.mrf.mxu0
      %v480 = vadd.f32 %v388, %v479
      %481 = vmatmul.f32.gmra.mxu0 %v418
      %v482 = vpop.f32.mrf.mxu0
      %v483 = vadd.f32 %v388, %v482
      %484 = vmatmul.f32.gmra.mxu0 %v421
      %v485 = vpop.f32.mrf.mxu0
      %v486 = vadd.f32 %v388, %v485
      %487 = vmatmul.f32.gmra.mxu0 %v424
      %v488 = vpop.f32.mrf.mxu0
      %v489 = vadd.f32 %v388, %v488
      %490 = vmatmul.f32.gmra.mxu0 %v427
      %v491 = vpop.f32.mrf.mxu0
      %v492 = vadd.f32 %v388, %v491
      %493 = vmatmul.f32.gmra.mxu0 %v430
      %v494 = vpop.f32.mrf.mxu0
      %v495 = vadd.f32 %v388, %v494
      %496 = vmatmul.f32.gmra.mxu0 %v433
      %v497 = vpop.f32.mrf.mxu0
      %v498 = vadd.f32 %v388, %v497
      %499 = vmatmul.f32.gmra.mxu0 %v436
      %v500 = vpop.f32.mrf.mxu0
      %v501 = vadd.f32 %v388, %v500
      %502 = vdwg.mxu0
      %vm503 = vcmask 64512
      %504 = vst.msk [vmem:[%s226] sm:$0xff] %vm503, %v456
      %505 = vst.msk [vmem:[%s226 + $0x8] sm:$0xff] %vm503, %v459
      %506 = vst.msk [vmem:[%s226 + $0x10] sm:$0xff] %vm503, %v462
      %507 = vst.msk [vmem:[%s226 + $0x18] sm:$0xff] %vm503, %v465
      %508 = vst.msk [vmem:[%s226 + $0x20] sm:$0xff] %vm503, %v468
      %509 = vst.msk [vmem:[%s226 + $0x28] sm:$0xff] %vm503, %v471
      %510 = vst.msk [vmem:[%s226 + $0x30] sm:$0xff] %vm503, %v474
      %511 = vst.msk [vmem:[%s226 + $0x38] sm:$0xff] %vm503, %v477
      %512 = vst.msk [vmem:[%s226 + $0x40] sm:$0xff] %vm503, %v480
      %513 = vst.msk [vmem:[%s226 + $0x48] sm:$0xff] %vm503, %v483
      %514 = vst.msk [vmem:[%s226 + $0x50] sm:$0xff] %vm503, %v486
      %515 = vst.msk [vmem:[%s226 + $0x58] sm:$0xff] %vm503, %v489
      %516 = vst.msk [vmem:[%s226 + $0x60] sm:$0xff] %vm503, %v492
      %517 = vst.msk [vmem:[%s226 + $0x68] sm:$0xff] %vm503, %v495
      %518 = vst.msk [vmem:[%s226 + $0x70] sm:$0xff] %vm503, %v498
      %519 = vst.msk [vmem:[%s226 + $0x78] sm:$0xff] %vm503, %v501
      %s520 = smul.u32 16, %s16
      %p521 = scmp.lt.s32.totalorder %s520, 31
      %s522 = scalar_select %p521, %s520, 31
      %s523 = smul.addr %s522, 8
      %s524 = scalar_lea.vmem %s5, %s523
      // Predicated region
      $region41: #{simple_nn_forward.1} parent=39 // pred_check
        %p525 = pneg %p144
      $region42: #{simple_nn_forward.1} parent=39 // pred_check_branch
        %527 = sbr.rel (%p525) target = $region44
      $region43: #{simple_nn_forward.1} parent=39 // pred_region
        %s528 = smul.u32 16, %s16
      $region44: #{simple_nn_forward.1} parent=39 // pred_fallthru
        _
    $region40: #{simple_nn_forward.1} parent=5 // pred_fallthru
      _
    %p529 = scmp.le.s32.totalorder 2, %s11
    // Predicated region
    $region45: #{simple_nn_forward.1} parent=5 // pred_check
      %p530 = pneg %p529
    $region46: #{simple_nn_forward.1} parent=5 // pred_check_branch
      %532 = sbr.rel (%p530) target = $region48
    $region47: #{simple_nn_forward.1} parent=5 // pred_region
      %s533 = ssub.s32 %s11, 2
      // Predicated region
      $region49: #{simple_nn_forward.1} parent=47 // pred_check
        %p534 = pneg %p150
      $region50: #{simple_nn_forward.1} parent=47 // pred_check_branch
        %536 = sbr.rel (%p534) target = $region52
      $region51: #{simple_nn_forward.1} parent=47 // pred_region
        %s537 = smul.u32 16, %s17
        %p538 = scmp.lt.s32.totalorder %s537, 31
        %s539 = scalar_select %p538, %s537, 31
        %s540 = smul.addr %s539, 8
        %s541 = scalar_lea.vmem %s5, %s540
      $region52: #{simple_nn_forward.1} parent=47 // pred_fallthru
        _
    $region48: #{simple_nn_forward.1} parent=5 // pred_fallthru
      _
  $region6: #{simple_nn_forward.1} parent=0 // loop_footer
    %s15 = sadd.s32 1, %s11
  $region7: #{simple_nn_forward.1} parent=0 // loop_footer_branch
    %10 = sbr.rel target = $region3
  $region8: #{simple_nn_forward.1} parent=0 // loop_exit
    _

</llo_original>
